<compile_context>
chip_gen: v6e
topology: v6e:2x2x1
jax: 0.10.0
libtpu: 0.0.40
codegen_flags: <defaults>
</compile_context>

<pallas_src>
import functools

import jax
import jax.numpy as jnp
from jax.experimental import pallas as pl
from jax.experimental.pallas import tpu as pltpu


def _round_up(x: int, m: int) -> int:
    return ((x + m - 1) // m) * m


def _head_kernel(x_ref, w_ref, o_ref):
    """One batch tile: o = x @ w.T (single MXU dot, lane-dense output, no reduction grid).

    x_ref: (block_b, F_pad) float32
    w_ref: (C_pad,  F_pad) bfloat16  -- constant block index => fetched from HBM once
    o_ref: (block_b, C_pad) float32
    """
    x_bf16 = x_ref[...].astype(jnp.bfloat16)
    o_ref[...] = jax.lax.dot_general(
        x_bf16,
        w_ref[...],
        dimension_numbers=(((1,), (1,)), ((), ())),  # contract feature dims directly
        preferred_element_type=jnp.float32,
    ).astype(o_ref.dtype)


@functools.partial(jax.jit, static_argnames=("block_b",))
def vgg_head_forward(x, w, *, block_b=None):
    """y = x @ w.T (bias-free Linear), matching nn.Linear(input_shape, num_classes, bias=False).

    x: (B, input_shape) float32
    w: (num_classes, input_shape) float32  (PyTorch layout)
    returns: (B, num_classes) float32
    """
    B, F = x.shape
    C, F2 = w.shape
    assert F == F2, "feature dims must match"

    # Lane-dense / (8,128)-friendly padding.
    C_pad = _round_up(C, 128)
    F_pad = _round_up(F, 128)
    if block_b is None:
        block_b = min(_round_up(B, 8), 128)
    B_pad = _round_up(B, block_b)

    x_p = x
    if B_pad != B or F_pad != F:
        x_p = jnp.pad(x, ((0, B_pad - B), (0, F_pad - F)))

    # Pad classes with zero rows (sliced off below) and cast once to bf16.
    w_p = jnp.pad(w, ((0, C_pad - C), (0, F_pad - F))).astype(jnp.bfloat16)

    grid = (B_pad // block_b,)

    y_p = pl.pallas_call(
        _head_kernel,
        out_shape=jax.ShapeDtypeStruct((B_pad, C_pad), x.dtype),
        grid_spec=pltpu.PrefetchScalarGridSpec(
            num_scalar_prefetch=0,
            grid=grid,
            in_specs=[
                # x batch tile
                pl.BlockSpec((block_b, F_pad), lambda i: (i, 0)),
                # whole (padded) weight; constant block index -> DMA'd once, reused per tile
                pl.BlockSpec((C_pad, F_pad), lambda i: (0, 0)),
            ],
            out_specs=pl.BlockSpec((block_b, C_pad), lambda i: (i, 0)),
        ),
        compiler_params=pltpu.CompilerParams(
            dimension_semantics=("parallel",),
        ),
    )(x_p, w_p)

    return y_p[:B, :C]


if __name__ == "__main__":
    # Small, module-consistent shapes: VGG_head(input_shape=256, num_classes=16)
    B, F, C = 8, 256, 16

    key = jax.random.PRNGKey(0)
    kx, kw = jax.random.split(key)

    x = jax.random.normal(kx, (B, F), dtype=jnp.float32)
    # Deterministic synthetic weight init (stand-in for modelutils.initialize_weights):
    # normal(0, 0.01), typical for classifier heads.
    w = 0.01 * jax.random.normal(kw, (C, F), dtype=jnp.float32)

    y = vgg_head_forward(x, w)
    jax.block_until_ready(y)
    assert y.shape == (B, C)

    # Reference 1: exact same computation (bf16 operands, f32 accumulation) in plain JAX.
    y_ref_bf16 = jax.lax.dot_general(
        x.astype(jnp.bfloat16),
        w.astype(jnp.bfloat16),
        dimension_numbers=(((1,), (1,)), ((), ())),
        preferred_element_type=jnp.float32,
    )
    # Reference 2: full fp32 reference (== PyTorch F.linear(x, w)); loose tolerance
    # accounts for the bf16 operand cast.
    y_ref_f32 = x @ w.T

    assert jnp.allclose(y, y_ref_bf16, atol=1e-4, rtol=1e-3)
    assert jnp.allclose(y, y_ref_f32, atol=5e-3, rtol=5e-2)

    print("KERNEL_OK")
</pallas_src>

<mosaic_0001>
module attributes {stable_mosaic.version = 11 : i64} {
  func.func @_head_kernel(%arg0: i32, %arg1: memref<8x256xf32, #tpu.memory_space<vmem>>, %arg2: memref<128x256xbf16, #tpu.memory_space<vmem>>, %arg3: memref<8x128xf32, #tpu.memory_space<vmem>>) attributes {dimension_semantics = [#tpu.dimension_semantics<parallel>], iteration_bounds = array<i64: 1>, scalar_prefetch = 0 : i64, scratch_operands = 0 : i64, tpu.core_type = #tpu.core_type<tc>, window_params = [{transform_indices = @transform_0, window_bounds = array<i64: 8, 256>}, {pipeline_mode = #tpu.pipeline_mode<synchronous>, transform_indices = @transform_1, window_bounds = array<i64: 128, 256>}, {transform_indices = @transform_2, window_bounds = array<i64: 8, 128>}]} {
    %c0 = arith.constant 0 : index
    %c0_0 = arith.constant 0 : index
    %0 = vector.load %arg1[%c0, %c0_0] : memref<8x256xf32, #tpu.memory_space<vmem>>, vector<8x256xf32>
    %1 = arith.truncf %0 : vector<8x256xf32> to vector<8x256xbf16>
    %c0_1 = arith.constant 0 : index
    %c0_2 = arith.constant 0 : index
    %2 = vector.load %arg2[%c0_1, %c0_2] : memref<128x256xbf16, #tpu.memory_space<vmem>>, vector<128x256xbf16>
    %cst = arith.constant dense<0.000000e+00> : vector<8x128xf32>
    %3 = tpu.matmul %1, %2, %cst {dimension_numbers = #tpu.dot_dimension_numbers<[1], [1], [0], [0], [0, 0, 1, 0], [], []>} : vector<8x256xbf16>, vector<128x256xbf16>, vector<8x128xf32> -> vector<8x128xf32>
    %c0_3 = arith.constant 0 : index
    %c0_4 = arith.constant 0 : index
    %4 = vector.load %arg3[%c0_3, %c0_4] : memref<8x128xf32, #tpu.memory_space<vmem>>, vector<8x128xf32>
    tpu.vector_store %arg3[%c0_3, %c0_4], %3 {strides = array<i32>} : memref<8x128xf32, #tpu.memory_space<vmem>>, vector<8x128xf32>,
    return
  }
  func.func @transform_0(%arg0: i32) -> (i32, i32) {
    %c0_i32 = arith.constant 0 : i32
    %c0_i32_0 = arith.constant 0 : i32
    return %arg0, %c0_i32 : i32, i32
  }
  func.func @transform_1(%arg0: i32) -> (i32, i32) {
    %c0_i32 = arith.constant 0 : i32
    %c0_i32_0 = arith.constant 0 : i32
    %c0_i32_1 = arith.constant 0 : i32
    return %c0_i32, %c0_i32_0 : i32, i32
  }
  func.func @transform_2(%arg0: i32) -> (i32, i32) {
    %c0_i32 = arith.constant 0 : i32
    %c0_i32_0 = arith.constant 0 : i32
    return %arg0, %c0_i32 : i32, i32
  }
}

</mosaic_0001>

<llo_original>
// kernel: vgg_head_forward.1
$region0: #{vgg_head_forward.1}
  #allocation0 [shape = 'u32[]', space=smem, size = 0x4, offset = 0x4, fixed_abs, tag = 'smem constant byte address 0x4 - core index']
  #allocation1 [shape = 'u32[144,128]{1,0:T(1,128)}', space=vmem, size = 0x12000, scoped, tag = 'internal scratch']
  %s0 = inlined_call_operand.vmem [shape: f32[8,256], index: 0, kind: input, shape index: {}]
  %s1 = inlined_call_operand.vmem [shape: bf16[128,256], index: 1, kind: input, shape index: {}]
  %s2 = inlined_call_operand.hbm [shape: f32[8,128], index: 2, kind: output, shape index: {}]
  %s3 = sld [smem:[#allocation0]]
  $region18: #{vgg_head_forward.1} parent=0
    _
  %s5 = ssub.s32 1, %s3
  %s6 = scalar_select 0, %s5, %s3
  $region1: #{vgg_head_forward.1} parent=0
    #allocation2 [shape = 'u8[4096]{0}', space=vmem, size = 0x1000, scoped, tag = 'output window, operand 0, single buffered']
    #allocation3 [shape = 's32[1]{0}', space=sflag, size = 0x4, scoped, tag = 'scoped memory for vgg_head_forward.1']
    %7 = vsyncpa [#allocation3], 0
    // Predicated region
    $region2: #{vgg_head_forward.1} parent=1 // pred_check
      _
    $region3: #{vgg_head_forward.1} parent=1 // pred_check_branch
      %9 = sbr.rel (0) target = $region5
    $region4: #{vgg_head_forward.1} parent=1 // pred_region
      _
    $region5: #{vgg_head_forward.1} parent=1 // pred_fallthru
      _
    // Predicated region
    $region6: #{vgg_head_forward.1} parent=1 // pred_check
      _
    $region7: #{vgg_head_forward.1} parent=1 // pred_check_branch
      %11 = sbr.rel (0) target = $region9
    $region8: #{vgg_head_forward.1} parent=1 // pred_region
      _
    $region9: #{vgg_head_forward.1} parent=1 // pred_fallthru
      _
    %v13 = vld [vmem:[%s0] sm:$0xff]
    %v14 = vld [vmem:[%s0 + $0x8] sm:$0xff]
    %v15 = vpack.c.bf16 %v13, %v13
    %v16 = vpack.c.bf16 %v14, %v14
    %v17 = vld [vmem:[%s1] sm:$0xff]
    %v18 = vld [vmem:[%s1 + $0x8] sm:$0xff]
    %v19 = vld [vmem:[%s1 + $0x10] sm:$0xff]
    %v20 = vld [vmem:[%s1 + $0x18] sm:$0xff]
    %v21 = vld [vmem:[%s1 + $0x20] sm:$0xff]
    %v22 = vld [vmem:[%s1 + $0x28] sm:$0xff]
    %v23 = vld [vmem:[%s1 + $0x30] sm:$0xff]
    %v24 = vld [vmem:[%s1 + $0x38] sm:$0xff]
    %v25 = vld [vmem:[%s1 + $0x40] sm:$0xff]
    %v26 = vld [vmem:[%s1 + $0x48] sm:$0xff]
    %v27 = vld [vmem:[%s1 + $0x50] sm:$0xff]
    %v28 = vld [vmem:[%s1 + $0x58] sm:$0xff]
    %v29 = vld [vmem:[%s1 + $0x60] sm:$0xff]
    %v30 = vld [vmem:[%s1 + $0x68] sm:$0xff]
    %v31 = vld [vmem:[%s1 + $0x70] sm:$0xff]
    %v32 = vld [vmem:[%s1 + $0x78] sm:$0xff]
    %v49 = vunpack.c.l.b16 %v17
    %v50 = vunpack.c.h.b16 %v17
    %v51 = vunpack.c.l.b16 %v18
    %v52 = vunpack.c.h.b16 %v18
    %v53 = vunpack.c.l.b16 %v19
    %v54 = vunpack.c.h.b16 %v19
    %v55 = vunpack.c.l.b16 %v20
    %v56 = vunpack.c.h.b16 %v20
    %v57 = vunpack.c.l.b16 %v21
    %v58 = vunpack.c.h.b16 %v21
    %v59 = vunpack.c.l.b16 %v22
    %v60 = vunpack.c.h.b16 %v22
    %v61 = vunpack.c.l.b16 %v23
    %v62 = vunpack.c.h.b16 %v23
    %v63 = vunpack.c.l.b16 %v24
    %v64 = vunpack.c.h.b16 %v24
    %v65 = vunpack.c.l.b16 %v25
    %v66 = vunpack.c.h.b16 %v25
    %v67 = vunpack.c.l.b16 %v26
    %v68 = vunpack.c.h.b16 %v26
    %v69 = vunpack.c.l.b16 %v27
    %v70 = vunpack.c.h.b16 %v27
    %v71 = vunpack.c.l.b16 %v28
    %v72 = vunpack.c.h.b16 %v28
    %v73 = vunpack.c.l.b16 %v29
    %v74 = vunpack.c.h.b16 %v29
    %v75 = vunpack.c.l.b16 %v30
    %v76 = vunpack.c.h.b16 %v30
    %v77 = vunpack.c.l.b16 %v31
    %v78 = vunpack.c.h.b16 %v31
    %v79 = vunpack.c.l.b16 %v32
    %v80 = vunpack.c.h.b16 %v32
    %v81 = vpack.c.b16 %v51, %v49
    %v82 = vpack.c.b16 %v52, %v50
    %v83 = vpack.c.b16 %v55, %v53
    %v84 = vpack.c.b16 %v56, %v54
    %v85 = vpack.c.b16 %v59, %v57
    %v86 = vpack.c.b16 %v60, %v58
    %v87 = vpack.c.b16 %v63, %v61
    %v88 = vpack.c.b16 %v64, %v62
    %v89 = vpack.c.b16 %v67, %v65
    %v90 = vpack.c.b16 %v68, %v66
    %v91 = vpack.c.b16 %v71, %v69
    %v92 = vpack.c.b16 %v72, %v70
    %v93 = vpack.c.b16 %v75, %v73
    %v94 = vpack.c.b16 %v76, %v74
    %v95 = vpack.c.b16 %v79, %v77
    %v96 = vpack.c.b16 %v80, %v78
    %113 = vmatprep.subr.bf16.mxu0 %v96
    %114 = vmatpush1.bf16.xpose.msra.mxu0 %v95
    %115 = vmatprep.subr.bf16.mxu0 %v94
    %116 = vmatpush1.bf16.xpose.msra.mxu0 %v93
    %117 = vmatprep.subr.bf16.mxu0 %v92
    %118 = vmatpush1.bf16.xpose.msra.mxu0 %v91
    %119 = vmatprep.subr.bf16.mxu0 %v90
    %120 = vmatpush1.bf16.xpose.msra.mxu0 %v89
    %121 = vmatprep.subr.bf16.mxu0 %v88
    %122 = vmatpush1.bf16.xpose.msra.mxu0 %v87
    %123 = vmatprep.subr.bf16.mxu0 %v86
    %124 = vmatpush1.bf16.xpose.msra.mxu0 %v85
    %125 = vmatprep.subr.bf16.mxu0 %v84
    %126 = vmatpush1.bf16.xpose.msra.mxu0 %v83
    %127 = vmatprep.subr.bf16.mxu0 %v82
    %128 = vmatpush1.bf16.xpose.msra.mxu0 %v81
    %129 = vmatprep.subr.bf16.mxu0 0
    %130 = vmatpush2.bf16.xpose.msra.mxu0 0
    %131 = vmatprep.subr.bf16.mxu0 0
    %132 = vmatpush2.bf16.xpose.msra.mxu0 0
    %133 = vmatprep.subr.bf16.mxu0 0
    %134 = vmatpush2.bf16.xpose.msra.mxu0 0
    %135 = vmatprep.subr.bf16.mxu0 0
    %136 = vmatpush2.bf16.xpose.msra.mxu0 0
    %137 = vmatprep.subr.bf16.mxu0 0
    %138 = vmatpush2.bf16.xpose.msra.mxu0 0
    %139 = vmatprep.subr.bf16.mxu0 0
    %140 = vmatpush2.bf16.xpose.msra.mxu0 0
    %141 = vmatprep.subr.bf16.mxu0 0
    %142 = vmatpush2.bf16.xpose.msra.mxu0 0
    %143 = vmatprep.subr.bf16.mxu0 0
    %144 = vmatpush2.bf16.xpose.msra.mxu0 0
    %145 = vmatprep.mubr.bf16.mxu0 %v16
    %146 = vmatmul.mubr.bf16.gmra.mxu0 %v15
    %v147 = vpop.f32.mrf.mxu0
    %v148 = vadd.f32 0.0, %v147
    %v149 = vpop.f32.mrf.mxu0
    %v150 = vpop.f32.mrf.mxu0
    %v151 = vpop.f32.mrf.mxu0
    %152 = vdwg.mxu0
    %153 = vst [vmem:[#allocation2] sm:$0xff] %v148
    // Predicated region
    $region10: #{vgg_head_forward.1} parent=1 // pred_check
      _
    $region11: #{vgg_head_forward.1} parent=1 // pred_check_branch
      %155 = sbr.rel (0) target = $region13
    $region12: #{vgg_head_forward.1} parent=1 // pred_region
      %s157 = ssub.s32 128, 128
      %158 = vsyncadd [#allocation3], %s157
      %s160 = sshll.u32 [#allocation2], 4
      %s161 = int_to_ptr.vmem [resolvable:$true] %s160
      %163 = dma.vmem_to_hbm [thread:$0]  %s161, 128, %s2, [#allocation3]
    $region13: #{vgg_head_forward.1} parent=1 // pred_fallthru
      _
    // Predicated region
    $region14: #{vgg_head_forward.1} parent=1 // pred_check
      _
    $region15: #{vgg_head_forward.1} parent=1 // pred_check_branch
      %165 = sbr.rel (0) target = $region17
    $region16: #{vgg_head_forward.1} parent=1 // pred_region
      %166 = dma.done [#allocation3], 128
    $region17: #{vgg_head_forward.1} parent=1 // pred_fallthru
      _
    %167 = vsyncpa [#allocation3], 1

</llo_original>
